<compile_context>
chip_gen: v7x
topology: tpu7x:2x2x1
jax: 0.10.0
libtpu: 0.0.40
codegen_flags: <defaults>
</compile_context>

<pallas_src>
import functools

import jax
import jax.numpy as jnp
from jax.experimental import pallas as pl
from jax.experimental.pallas import tpu as pltpu


# ----------------------------------------------------------------------------
# Fused Pallas kernel: 3-layer 3x3 'same' conv generator, lane-dense.
# ----------------------------------------------------------------------------
def generator_kernel(x_ref, w_ref, b_ref, o_ref):
    """Fused generator forward (all conv layers chained on-chip).

    x_ref: (N, H, W*C)              activations, channels folded into the lane axis
    w_ref: (L, 3, W*C_in, W*C_out)  banded weights, one matrix per layer & vertical tap
    b_ref: (L, 1, W*C_out)          biases tiled over W (w-major, channel-minor)
    o_ref: (N, H, W*C)
    """
    f32 = jnp.float32
    n, h, wc = x_ref.shape
    m = n * h
    n_layers = w_ref.shape[0]

    # Fold the batch into the matmul M dimension.  This is a free layout collapse
    # because H % 8 == 0 and the last dim is already lane-dense (guarded in wrapper).
    x = x_ref[...].reshape(m, wc).astype(f32)

    # Per-image top/bottom edge masks for the vertical halo, built ONCE and reused by
    # every layer.  pltpu.roll wraps across image boundaries; the wrapped row is zeroed.
    row = jax.lax.broadcasted_iota(jnp.int32, (m, wc), 0) % h
    not_top = row != 0          # row i-1 exists inside the same image
    not_bot = row != (h - 1)    # row i+1 exists inside the same image
    zero = jnp.zeros((m, wc), f32)

    for l in range(n_layers):   # static unroll over layers (L = 3)
        # Vertical halo: two XLU sublane rotations + selects (no matmuls, no padding).
        x_prev = jnp.where(not_top, pltpu.roll(x, shift=1, axis=0), zero)      # x[i-1]
        x_next = jnp.where(not_bot, pltpu.roll(x, shift=m - 1, axis=0), zero)  # x[i+1]

        # Bias folded into the accumulator init; horizontal (kw) taps live inside the
        # banded weight, vertical (kh) taps are the three accumulating dots.
        # NOTE(v5e/v6e): the three dots could be fused into one K=3*W*C push (halves
        # MRF result-path traffic) by lane-concatenating [x_prev | x | x_next]; only
        # worth it if the MRF vpop+vadd chain shows on the critical path.  Skip on
        # v7x (MRB accumulates in place).
        acc = b_ref[l].astype(f32) + jnp.dot(
            x_prev, w_ref[l, 0], preferred_element_type=f32)                    # kh = 0
        acc = acc + jnp.dot(x,      w_ref[l, 1], preferred_element_type=f32)    # kh = 1
        acc = acc + jnp.dot(x_next, w_ref[l, 2], preferred_element_type=f32)    # kh = 2
        if l < n_layers - 1:
            acc = jnp.where(acc >= 0, acc, 0.2 * acc)                            # LeakyReLU(0.2)
        x = acc

    o_ref[...] = x.reshape(n, h, wc).astype(o_ref.dtype)   # lane-dense, unmasked stores


def generator_forward_lane_dense(x_ld, w_all, b_all):
    """x_ld: (N, H, W*C), w_all: (L, 3, W*C, W*C), b_all: (L, 1, W*C)."""
    n, h, wc = x_ld.shape
    # Single invocation, whole arrays in VMEM (~0.6 MiB total): the workload is
    # launch-bound at this size, so no grid / BlockSpecs / dimension_semantics.
    # NOTE(v7x): at real StyleGAN widths, add a leading "parallel" grid axis over
    # batch/rows for the 2 TensorCores, re-derive tiles against 64 MiB VMEM, and drop
    # the banded-weight formulation (it grows as (W*C)^2).
    # NOTE(v6e): each dot is (32,128)@(128,128) -> the 2x256^2 MXU is under-filled;
    # when batch/spatial grow, keep folding rows so M >= 256 before adding grid steps.
    return pl.pallas_call(
        generator_kernel,
        out_shape=jax.ShapeDtypeStruct((n, h, wc), jnp.float32),
    )(x_ld, w_all, b_all)


# ----------------------------------------------------------------------------
# Wrapper-side weight packing (tiny; non-deformed layers are packed once in __init__).
# ----------------------------------------------------------------------------
def _banded_weight(w_oihw, width):
    """(C_out, C_in, 3, 3) OIHW weight -> (3, W*C_in, W*C_out) banded matrices.

    banded[kh, w_src*C_in + ci, w_dst*C_out + co] = W[co, ci, kh, kw]
    with w_src = w_dst + kw - 1 ('same' padding; out-of-range taps are dropped, which
    is exactly the zero-padding contribution).
    """
    c_out, c_in, kh, kw = w_oihw.shape
    w_hwio = jnp.transpose(w_oihw, (2, 3, 1, 0)).astype(jnp.float32)     # (3,3,ci,co)
    pos = jnp.arange(width)
    sel = (pos[None, :, None] ==
           pos[None, None, :] + jnp.arange(kw)[:, None, None] - 1)       # (3, W, W)
    banded = jnp.einsum('kpw,hkio->hpiwo', sel.astype(jnp.float32), w_hwio)
    return banded.reshape(kh, width * c_in, width * c_out)


def _make_jitted_forward(banded_static, b_all, def_w_shape, u, s, vh, layer_ix, width):
    n_layers = len(banded_static)
    c_out, c_in, kx, ky = def_w_shape

    def fwd(x_nchw, eigen_delta):
        n, c, h, w = x_nchw.shape
        assert w == width and c == c_in
        # Guard for the free (N,H)->(N*H) collapse and lane-dense stores in the kernel.
        assert h % 8 == 0 and (w * c) % 128 == 0, "lane-dense layout guard"

        # NCHW -> lane-dense (N, H, W*C): channels ride the 128-lane axis (once per fwd).
        x_ld = jnp.transpose(x_nchw, (0, 2, 3, 1)).reshape(n, h, w * c).astype(jnp.float32)

        # SVD-basis weight deformation: W_eff = U diag(S + delta) Vh.  Only this layer
        # is repacked per call; 8x8 @ 8x72 is far below kernel-launch cost -> plain JAX.
        w_flat = (u * (s + eigen_delta)[None, :]) @ vh
        banded_def = _banded_weight(w_flat.reshape(c_out, c_in, kx, ky), w)

        w_all = jnp.stack(
            [banded_def if l == layer_ix else banded_static[l] for l in range(n_layers)],
            axis=0)                                           # (L, 3, W*C_in, W*C_out)

        y_ld = generator_forward_lane_dense(x_ld, w_all, b_all)
        y = y_ld.reshape(n, h, w, c_out)
        return jnp.transpose(y, (0, 3, 1, 2))                 # back to NCHW

    return jax.jit(fwd)


# ----------------------------------------------------------------------------
# Synthetic generator with SVD weight deformator at layer_ix
# ----------------------------------------------------------------------------
class GeneratorWithWeightDeformatorPallas:
    # TODO(synk): 'svd_rectification' / 'hessian*' variants need torch.load'ed
    # checkpoints and save_deformation() needs torch.save; only the 'svd' path
    # (the default forward semantics) is implemented here.
    def __init__(self, channels=8, width=16, layer_ix=1, n_layers=3, key=None):
        self.layer_ix = layer_ix
        self.deformator_type = "svd"
        self.width = width
        key = jax.random.PRNGKey(0) if key is None else key
        keys = jax.random.split(key, 2 * n_layers)
        self.weights = []   # OIHW, like PyTorch conv weights (c_out, c_in, 3, 3)
        self.biases = []
        for l in range(n_layers):
            self.weights.append(0.1 * jax.random.normal(
                keys[2 * l], (channels, channels, 3, 3), dtype=jnp.float32))
            self.biases.append(0.05 * jax.random.normal(
                keys[2 * l + 1], (channels,), dtype=jnp.float32))

        # --- WeightDeformatorSVDBasis setup on the conv at layer_ix (setup glue) ---
        c_out, c_in, kx, ky = self.weights[layer_ix].shape
        self.directions_count = min(kx * ky * c_in, c_out)
        w_flat = self.weights[layer_ix].reshape(c_out, c_in * kx * ky)
        u, s, vh = jnp.linalg.svd(w_flat, full_matrices=False)
        self.u, self.s, self.vh = u, s, vh
        # direction_to_eigenvalues_delta = eye(directions_count), as in __create_wd_svd
        self.direction_to_eigenvalues_delta = jnp.eye(self.directions_count,
                                                      dtype=jnp.float32)
        self._eigen_delta = jnp.zeros((self.directions_count,), jnp.float32)

        # Pack the eigen_delta-INDEPENDENT layers once (banded weights + tiled biases);
        # only the deformed layer is repacked inside the jitted forward.
        banded_static = [None if l == layer_ix else _banded_weight(self.weights[l], width)
                         for l in range(n_layers)]
        b_all = jnp.stack(
            [jnp.tile(self.biases[l], width).reshape(1, width * channels)
             for l in range(n_layers)], axis=0)               # (L, 1, W*C)

        # eigen_delta is a traced argument, so deformate() never forces a retrace.
        self._fwd = _make_jitted_forward(banded_static, b_all,
                                         self.weights[layer_ix].shape,
                                         self.u, self.s, self.vh, layer_ix, width)

    def deformate(self, direction_ix, shift_scale):
        self._eigen_delta = (shift_scale *
                             self.direction_to_eigenvalues_delta[direction_ix])

    def forward(self, x_nchw):
        return self._fwd(x_nchw, self._eigen_delta)

    __call__ = forward


# ----------------------------------------------------------------------------
# Pure-JAX reference for a sanity check
# ----------------------------------------------------------------------------
def _ref_forward(model, x_nchw):
    x = jnp.transpose(x_nchw, (0, 2, 3, 1)).astype(jnp.float32)
    n_layers = len(model.weights)
    for l in range(n_layers):
        if l == model.layer_ix:
            c_out, c_in, kx, ky = model.weights[l].shape
            s_new = model.s + model._eigen_delta
            w_flat = (model.u * s_new[None, :]) @ model.vh
            w_oihw = w_flat.reshape(c_out, c_in, kx, ky)
        else:
            w_oihw = model.weights[l]
        w_hwio = jnp.transpose(w_oihw, (2, 3, 1, 0))
        y = jax.lax.conv_general_dilated(
            x, w_hwio, window_strides=(1, 1), padding="SAME",
            dimension_numbers=("NHWC", "HWIO", "NHWC"))
        y = y + model.biases[l][None, None, None, :]
        if l < n_layers - 1:
            y = jnp.where(y >= 0, y, 0.2 * y)
        x = y
    return jnp.transpose(x, (0, 3, 1, 2))


if __name__ == "__main__":
    key = jax.random.PRNGKey(0)
    k_model, k_x = jax.random.split(key)

    N, C, H, W = 2, 8, 16, 16       # W*C = 128 -> fully lane-dense
    model = GeneratorWithWeightDeformatorPallas(channels=C, width=W, layer_ix=1,
                                                n_layers=3, key=k_model)
    # Deterministic deformation (direction 0, shift 0.5) exercising the SVD path.
    model.deformate(direction_ix=0, shift_scale=0.5)

    x = jax.random.normal(k_x, (N, C, H, W), dtype=jnp.float32)

    out = jax.block_until_ready(model(x))

    ref = jax.block_until_ready(_ref_forward(model, x))
    assert out.shape == (N, C, H, W)
    assert jnp.allclose(out, ref, atol=1e-4, rtol=1e-4), "mismatch vs reference"

    print("KERNEL_OK")
</pallas_src>

<mosaic_0001>
module attributes {stable_mosaic.version = 11 : i64} {
  func.func @generator_kernel(%arg0: memref<2x16x128xf32, #tpu.memory_space<vmem>>, %arg1: memref<3x3x128x128xf32, #tpu.memory_space<vmem>>, %arg2: memref<3x1x128xf32, #tpu.memory_space<vmem>>, %arg3: memref<2x16x128xf32, #tpu.memory_space<vmem>>) attributes {dimension_semantics = [], scalar_prefetch = 0 : i64, scratch_operands = 0 : i64, tpu.core_type = #tpu.core_type<tc>} {
    %c0 = arith.constant 0 : index
    %c0_0 = arith.constant 0 : index
    %c0_1 = arith.constant 0 : index
    %0 = vector.load %arg0[%c0, %c0_0, %c0_1] : memref<2x16x128xf32, #tpu.memory_space<vmem>>, vector<2x16x128xf32>
    %1 = vector.shape_cast %0 : vector<2x16x128xf32> to vector<32x128xf32>
    %2 = tpu.iota {dimensions = array<i32: 0>} : vector<32x128xi32>
    %c16_i32 = arith.constant 16 : i32
    %c0_i32 = arith.constant 0 : i32
    %3 = arith.cmpi eq, %c16_i32, %c0_i32 : i32
    %c1_i32 = arith.constant 1 : i32
    %4 = arith.select %3, %c1_i32, %c16_i32 : i32
    %5 = vector.broadcast %4 : i32 to vector<32x128xi32>
    %6 = arith.remsi %2, %5 : vector<32x128xi32>
    %c0_i32_2 = arith.constant 0 : i32
    %7 = vector.broadcast %c0_i32_2 : i32 to vector<32x128xi32>
    %8 = arith.cmpi ne, %6, %7 : vector<32x128xi32>
    %c0_i32_3 = arith.constant 0 : i32
    %9 = vector.broadcast %c0_i32_3 : i32 to vector<32x128xi32>
    %10 = arith.cmpi slt, %6, %9 : vector<32x128xi32>
    %c0_i32_4 = arith.constant 0 : i32
    %11 = arith.cmpi slt, %4, %c0_i32_4 : i32
    %12 = vector.broadcast %11 : i1 to vector<32x128xi1>
    %13 = vector.broadcast %12 : vector<32x128xi1> to vector<32x128xi1>
    %14 = arith.xori %10, %13 : vector<32x128xi1>
    %15 = arith.andi %14, %8 : vector<32x128xi1>
    %16 = vector.broadcast %4 : i32 to vector<32x128xi32>
    %17 = arith.addi %6, %16 : vector<32x128xi32>
    %18 = arith.select %15, %17, %6 : vector<32x128xi1>, vector<32x128xi32>
    %c0_i32_5 = arith.constant 0 : i32
    %19 = vector.broadcast %c0_i32_5 : i32 to vector<32x128xi32>
    %20 = arith.cmpi ne, %18, %19 : vector<32x128xi32>
    %c15_i32 = arith.constant 15 : i32
    %21 = vector.broadcast %c15_i32 : i32 to vector<32x128xi32>
    %22 = arith.cmpi ne, %18, %21 : vector<32x128xi32>
    %cst = arith.constant 0.000000e+00 : f32
    %23 = vector.broadcast %cst : f32 to vector<32x128xf32>
    %c1_i32_6 = arith.constant 1 : i32
    %24 = tpu.dynamic_rotate %1 by %c1_i32_6 dim 0 : vector<32x128xf32>, i32 -> vector<32x128xf32>
    %25 = arith.select %20, %24, %23 : vector<32x128xi1>, vector<32x128xf32>
    %c31_i32 = arith.constant 31 : i32
    %26 = tpu.dynamic_rotate %1 by %c31_i32 dim 0 : vector<32x128xf32>, i32 -> vector<32x128xf32>
    %27 = arith.select %22, %26, %23 : vector<32x128xi1>, vector<32x128xf32>
    %c0_7 = arith.constant 0 : index
    %c0_8 = arith.constant 0 : index
    %c0_9 = arith.constant 0 : index
    %28 = vector.load %arg2[%c0_7, %c0_8, %c0_9] : memref<3x1x128xf32, #tpu.memory_space<vmem>>, vector<1x1x128xf32>
    %29 = vector.shape_cast %28 : vector<1x1x128xf32> to vector<1x128xf32>
    %c0_10 = arith.constant 0 : index
    %c0_11 = arith.constant 0 : index
    %c0_12 = arith.constant 0 : index
    %c0_13 = arith.constant 0 : index
    %30 = vector.load %arg1[%c0_10, %c0_11, %c0_12, %c0_13] : memref<3x3x128x128xf32, #tpu.memory_space<vmem>>, vector<1x1x128x128xf32>
    %31 = vector.shape_cast %30 : vector<1x1x128x128xf32> to vector<128x128xf32>
    %cst_14 = arith.constant dense<0.000000e+00> : vector<32x128xf32>
    %32 = tpu.matmul %25, %31, %cst_14 {dimension_numbers = #tpu.dot_dimension_numbers<[1], [0], [0], [1], [0, 0, 1, 1], [], []>} : vector<32x128xf32>, vector<128x128xf32>, vector<32x128xf32> -> vector<32x128xf32>
    %33 = vector.broadcast %29 : vector<1x128xf32> to vector<32x128xf32>
    %34 = arith.addf %33, %32 : vector<32x128xf32>
    %c0_15 = arith.constant 0 : index
    %c1 = arith.constant 1 : index
    %c0_16 = arith.constant 0 : index
    %c0_17 = arith.constant 0 : index
    %35 = vector.load %arg1[%c0_15, %c1, %c0_16, %c0_17] : memref<3x3x128x128xf32, #tpu.memory_space<vmem>>, vector<1x1x128x128xf32>
    %36 = vector.shape_cast %35 : vector<1x1x128x128xf32> to vector<128x128xf32>
    %cst_18 = arith.constant dense<0.000000e+00> : vector<32x128xf32>
    %37 = tpu.matmul %1, %36, %cst_18 {dimension_numbers = #tpu.dot_dimension_numbers<[1], [0], [0], [1], [0, 0, 1, 1], [], []>} : vector<32x128xf32>, vector<128x128xf32>, vector<32x128xf32> -> vector<32x128xf32>
    %38 = arith.addf %34, %37 : vector<32x128xf32>
    %c0_19 = arith.constant 0 : index
    %c2 = arith.constant 2 : index
    %c0_20 = arith.constant 0 : index
    %c0_21 = arith.constant 0 : index
    %39 = vector.load %arg1[%c0_19, %c2, %c0_20, %c0_21] : memref<3x3x128x128xf32, #tpu.memory_space<vmem>>, vector<1x1x128x128xf32>
    %40 = vector.shape_cast %39 : vector<1x1x128x128xf32> to vector<128x128xf32>
    %cst_22 = arith.constant dense<0.000000e+00> : vector<32x128xf32>
    %41 = tpu.matmul %27, %40, %cst_22 {dimension_numbers = #tpu.dot_dimension_numbers<[1], [0], [0], [1], [0, 0, 1, 1], [], []>} : vector<32x128xf32>, vector<128x128xf32>, vector<32x128xf32> -> vector<32x128xf32>
    %42 = arith.addf %38, %41 : vector<32x128xf32>
    %cst_23 = arith.constant 0.000000e+00 : f32
    %43 = vector.broadcast %cst_23 : f32 to vector<32x128xf32>
    %44 = arith.cmpf oge, %42, %43 : vector<32x128xf32>
    %cst_24 = arith.constant 2.000000e-01 : f32
    %45 = vector.broadcast %cst_24 : f32 to vector<32x128xf32>
    %46 = arith.mulf %45, %42 : vector<32x128xf32>
    %47 = arith.select %44, %42, %46 : vector<32x128xi1>, vector<32x128xf32>
    %c1_i32_25 = arith.constant 1 : i32
    %48 = tpu.dynamic_rotate %47 by %c1_i32_25 dim 0 : vector<32x128xf32>, i32 -> vector<32x128xf32>
    %49 = arith.select %20, %48, %23 : vector<32x128xi1>, vector<32x128xf32>
    %c31_i32_26 = arith.constant 31 : i32
    %50 = tpu.dynamic_rotate %47 by %c31_i32_26 dim 0 : vector<32x128xf32>, i32 -> vector<32x128xf32>
    %51 = arith.select %22, %50, %23 : vector<32x128xi1>, vector<32x128xf32>
    %c1_27 = arith.constant 1 : index
    %c0_28 = arith.constant 0 : index
    %c0_29 = arith.constant 0 : index
    %52 = vector.load %arg2[%c1_27, %c0_28, %c0_29] : memref<3x1x128xf32, #tpu.memory_space<vmem>>, vector<1x1x128xf32>
    %53 = vector.shape_cast %52 : vector<1x1x128xf32> to vector<1x128xf32>
    %c1_30 = arith.constant 1 : index
    %c0_31 = arith.constant 0 : index
    %c0_32 = arith.constant 0 : index
    %c0_33 = arith.constant 0 : index
    %54 = vector.load %arg1[%c1_30, %c0_31, %c0_32, %c0_33] : memref<3x3x128x128xf32, #tpu.memory_space<vmem>>, vector<1x1x128x128xf32>
    %55 = vector.shape_cast %54 : vector<1x1x128x128xf32> to vector<128x128xf32>
    %cst_34 = arith.constant dense<0.000000e+00> : vector<32x128xf32>
    %56 = tpu.matmul %49, %55, %cst_34 {dimension_numbers = #tpu.dot_dimension_numbers<[1], [0], [0], [1], [0, 0, 1, 1], [], []>} : vector<32x128xf32>, vector<128x128xf32>, vector<32x128xf32> -> vector<32x128xf32>
    %57 = vector.broadcast %53 : vector<1x128xf32> to vector<32x128xf32>
    %58 = arith.addf %57, %56 : vector<32x128xf32>
    %c1_35 = arith.constant 1 : index
    %c1_36 = arith.constant 1 : index
    %c0_37 = arith.constant 0 : index
    %c0_38 = arith.constant 0 : index
    %59 = vector.load %arg1[%c1_35, %c1_36, %c0_37, %c0_38] : memref<3x3x128x128xf32, #tpu.memory_space<vmem>>, vector<1x1x128x128xf32>
    %60 = vector.shape_cast %59 : vector<1x1x128x128xf32> to vector<128x128xf32>
    %cst_39 = arith.constant dense<0.000000e+00> : vector<32x128xf32>
    %61 = tpu.matmul %47, %60, %cst_39 {dimension_numbers = #tpu.dot_dimension_numbers<[1], [0], [0], [1], [0, 0, 1, 1], [], []>} : vector<32x128xf32>, vector<128x128xf32>, vector<32x128xf32> -> vector<32x128xf32>
    %62 = arith.addf %58, %61 : vector<32x128xf32>
    %c1_40 = arith.constant 1 : index
    %c2_41 = arith.constant 2 : index
    %c0_42 = arith.constant 0 : index
    %c0_43 = arith.constant 0 : index
    %63 = vector.load %arg1[%c1_40, %c2_41, %c0_42, %c0_43] : memref<3x3x128x128xf32, #tpu.memory_space<vmem>>, vector<1x1x128x128xf32>
    %64 = vector.shape_cast %63 : vector<1x1x128x128xf32> to vector<128x128xf32>
    %cst_44 = arith.constant dense<0.000000e+00> : vector<32x128xf32>
    %65 = tpu.matmul %51, %64, %cst_44 {dimension_numbers = #tpu.dot_dimension_numbers<[1], [0], [0], [1], [0, 0, 1, 1], [], []>} : vector<32x128xf32>, vector<128x128xf32>, vector<32x128xf32> -> vector<32x128xf32>
    %66 = arith.addf %62, %65 : vector<32x128xf32>
    %cst_45 = arith.constant 0.000000e+00 : f32
    %67 = vector.broadcast %cst_45 : f32 to vector<32x128xf32>
    %68 = arith.cmpf oge, %66, %67 : vector<32x128xf32>
    %cst_46 = arith.constant 2.000000e-01 : f32
    %69 = vector.broadcast %cst_46 : f32 to vector<32x128xf32>
    %70 = arith.mulf %69, %66 : vector<32x128xf32>
    %71 = arith.select %68, %66, %70 : vector<32x128xi1>, vector<32x128xf32>
    %c1_i32_47 = arith.constant 1 : i32
    %72 = tpu.dynamic_rotate %71 by %c1_i32_47 dim 0 : vector<32x128xf32>, i32 -> vector<32x128xf32>
    %73 = arith.select %20, %72, %23 : vector<32x128xi1>, vector<32x128xf32>
    %c31_i32_48 = arith.constant 31 : i32
    %74 = tpu.dynamic_rotate %71 by %c31_i32_48 dim 0 : vector<32x128xf32>, i32 -> vector<32x128xf32>
    %75 = arith.select %22, %74, %23 : vector<32x128xi1>, vector<32x128xf32>
    %c2_49 = arith.constant 2 : index
    %c0_50 = arith.constant 0 : index
    %c0_51 = arith.constant 0 : index
    %76 = vector.load %arg2[%c2_49, %c0_50, %c0_51] : memref<3x1x128xf32, #tpu.memory_space<vmem>>, vector<1x1x128xf32>
    %77 = vector.shape_cast %76 : vector<1x1x128xf32> to vector<1x128xf32>
    %c2_52 = arith.constant 2 : index
    %c0_53 = arith.constant 0 : index
    %c0_54 = arith.constant 0 : index
    %c0_55 = arith.constant 0 : index
    %78 = vector.load %arg1[%c2_52, %c0_53, %c0_54, %c0_55] : memref<3x3x128x128xf32, #tpu.memory_space<vmem>>, vector<1x1x128x128xf32>
    %79 = vector.shape_cast %78 : vector<1x1x128x128xf32> to vector<128x128xf32>
    %cst_56 = arith.constant dense<0.000000e+00> : vector<32x128xf32>
    %80 = tpu.matmul %73, %79, %cst_56 {dimension_numbers = #tpu.dot_dimension_numbers<[1], [0], [0], [1], [0, 0, 1, 1], [], []>} : vector<32x128xf32>, vector<128x128xf32>, vector<32x128xf32> -> vector<32x128xf32>
    %81 = vector.broadcast %77 : vector<1x128xf32> to vector<32x128xf32>
    %82 = arith.addf %81, %80 : vector<32x128xf32>
    %c2_57 = arith.constant 2 : index
    %c1_58 = arith.constant 1 : index
    %c0_59 = arith.constant 0 : index
    %c0_60 = arith.constant 0 : index
    %83 = vector.load %arg1[%c2_57, %c1_58, %c0_59, %c0_60] : memref<3x3x128x128xf32, #tpu.memory_space<vmem>>, vector<1x1x128x128xf32>
    %84 = vector.shape_cast %83 : vector<1x1x128x128xf32> to vector<128x128xf32>
    %cst_61 = arith.constant dense<0.000000e+00> : vector<32x128xf32>
    %85 = tpu.matmul %71, %84, %cst_61 {dimension_numbers = #tpu.dot_dimension_numbers<[1], [0], [0], [1], [0, 0, 1, 1], [], []>} : vector<32x128xf32>, vector<128x128xf32>, vector<32x128xf32> -> vector<32x128xf32>
    %86 = arith.addf %82, %85 : vector<32x128xf32>
    %c2_62 = arith.constant 2 : index
    %c2_63 = arith.constant 2 : index
    %c0_64 = arith.constant 0 : index
    %c0_65 = arith.constant 0 : index
    %87 = vector.load %arg1[%c2_62, %c2_63, %c0_64, %c0_65] : memref<3x3x128x128xf32, #tpu.memory_space<vmem>>, vector<1x1x128x128xf32>
    %88 = vector.shape_cast %87 : vector<1x1x128x128xf32> to vector<128x128xf32>
    %cst_66 = arith.constant dense<0.000000e+00> : vector<32x128xf32>
    %89 = tpu.matmul %75, %88, %cst_66 {dimension_numbers = #tpu.dot_dimension_numbers<[1], [0], [0], [1], [0, 0, 1, 1], [], []>} : vector<32x128xf32>, vector<128x128xf32>, vector<32x128xf32> -> vector<32x128xf32>
    %90 = arith.addf %86, %89 : vector<32x128xf32>
    %91 = vector.shape_cast %90 : vector<32x128xf32> to vector<2x16x128xf32>
    %c0_67 = arith.constant 0 : index
    %c0_68 = arith.constant 0 : index
    %c0_69 = arith.constant 0 : index
    %92 = vector.load %arg3[%c0_67, %c0_68, %c0_69] : memref<2x16x128xf32, #tpu.memory_space<vmem>>, vector<2x16x128xf32>
    tpu.vector_store %arg3[%c0_67, %c0_68, %c0_69], %91 {strides = array<i32>} : memref<2x16x128xf32, #tpu.memory_space<vmem>>, vector<2x16x128xf32>,
    return
  }
}

</mosaic_0001>

<llo_original>
// kernel: fwd.1
$region0: #{fwd.1}
  #allocation0 [shape = 'u32[]', space=smem, size = 0x4, offset = 0x4, fixed_abs, tag = 'smem constant byte address 0x4 - core index']
  #allocation1 [shape = 'u32[144,128]{1,0:T(1,128)}', space=vmem, size = 0x12000, scoped, tag = 'internal scratch']
  %s0 = inlined_call_operand.vmem [shape: f32[2,16,128], index: 0, kind: input, shape index: {}]
  %s1 = inlined_call_operand.vmem [shape: f32[3,3,128,128], index: 1, kind: input, shape index: {}]
  %s2 = inlined_call_operand.vmem [shape: f32[3,1,128], index: 2, kind: input, shape index: {}]
  %s3 = inlined_call_operand.vmem [shape: f32[2,16,128], index: 3, kind: output, shape index: {}]
  %s4 = sld [smem:[#allocation0]]
  $region22: #{fwd.1} parent=0
    _
  %s6 = ssub.s32 1, %s4
  %s7 = scalar_select 0, %s6, %s4
  // Predicated region
  $region2: #{fwd.1} parent=0 // pred_check
    _
  $region3: #{fwd.1} parent=0 // pred_check_branch
    %9 = sbr.rel (0) target = $region5
  $region4: #{fwd.1} parent=0 // pred_region
    _
  $region5: #{fwd.1} parent=0 // pred_fallthru
    _
  // Predicated region
  $region6: #{fwd.1} parent=0 // pred_check
    _
  $region7: #{fwd.1} parent=0 // pred_check_branch
    %11 = sbr.rel (0) target = $region9
  $region8: #{fwd.1} parent=0 // pred_region
    _
  $region9: #{fwd.1} parent=0 // pred_fallthru
    _
  // Predicated region
  $region10: #{fwd.1} parent=0 // pred_check
    _
  $region11: #{fwd.1} parent=0 // pred_check_branch
    %13 = sbr.rel (0) target = $region13
  $region12: #{fwd.1} parent=0 // pred_region
    _
  $region13: #{fwd.1} parent=0 // pred_fallthru
    _
  %v14 = vld [vmem:[%s0] sm:$0xff]
  %v15 = vld [vmem:[%s0 + $0x8] sm:$0xff]
  %v16 = vld [vmem:[%s0 + $0x10] sm:$0xff]
  %v17 = vld [vmem:[%s0 + $0x18] sm:$0xff]
  %v18 = vlaneseq
  %v19 = vshrl.u32 %v18, 7
  %v20 = vadd.s32 %v19, 8
  %v21 = vadd.s32 %v19, 16
  %v22 = vadd.s32 %v19, 24
  %vm23 = vcmp.lt.s32.totalorder %v19, 0
  %v24 = vsub.s32 0, %v19
  %v25 = vsel %vm23, %v24, %v19
  %v26 = vshrl.u32 %v25, 4
  %v27 = vand.u32 %v25, 15
  %v28 = vsub.s32 0, %v27
  %v29 = vsel %vm23, %v28, %v27
  %vm30 = vcmp.lt.s32.totalorder %v20, 0
  %v31 = vsub.s32 0, %v20
  %v32 = vsel %vm30, %v31, %v20
  %v33 = vshrl.u32 %v32, 4
  %v34 = vand.u32 %v32, 15
  %v35 = vsub.s32 0, %v34
  %v36 = vsel %vm30, %v35, %v34
  %vm37 = vcmp.lt.s32.totalorder %v21, 0
  %v38 = vsub.s32 0, %v21
  %v39 = vsel %vm37, %v38, %v21
  %v40 = vshrl.u32 %v39, 4
  %v41 = vand.u32 %v39, 15
  %v42 = vsub.s32 0, %v41
  %v43 = vsel %vm37, %v42, %v41
  %vm44 = vcmp.lt.s32.totalorder %v22, 0
  %v45 = vsub.s32 0, %v22
  %v46 = vsel %vm44, %v45, %v22
  %v47 = vshrl.u32 %v46, 4
  %v48 = vand.u32 %v46, 15
  %v49 = vsub.s32 0, %v48
  %v50 = vsel %vm44, %v49, %v48
  %vm51 = vcmp.ne.s32.totalorder %v29, 0
  %vm52 = vcmp.ne.s32.totalorder %v36, 0
  %vm53 = vcmp.ne.s32.totalorder %v43, 0
  %vm54 = vcmp.ne.s32.totalorder %v50, 0
  %vm55 = vcmp.lt.s32.totalorder %v29, 0
  %vm56 = vcmp.lt.s32.totalorder %v36, 0
  %vm57 = vcmp.lt.s32.totalorder %v43, 0
  %vm58 = vcmp.lt.s32.totalorder %v50, 0
  %vm59 = vmand %vm55, %vm51
  %vm60 = vmand %vm56, %vm52
  %vm61 = vmand %vm57, %vm53
  %vm62 = vmand %vm58, %vm54
  %v63 = vadd.s32 %v29, 16
  %v64 = vadd.s32 %v36, 16
  %v65 = vadd.s32 %v43, 16
  %v66 = vadd.s32 %v50, 16
  %v67 = vsel %vm59, %v63, %v29
  %v68 = vsel %vm60, %v64, %v36
  %v69 = vsel %vm61, %v65, %v43
  %v70 = vsel %vm62, %v66, %v50
  %vm71 = vcmp.ne.s32.totalorder %v67, 0
  %vm72 = vcmp.ne.s32.totalorder %v68, 0
  %vm73 = vcmp.ne.s32.totalorder %v69, 0
  %vm74 = vcmp.ne.s32.totalorder %v70, 0
  %vm75 = vcmp.ne.s32.totalorder %v67, 15
  %vm76 = vcmp.ne.s32.totalorder %v68, 15
  %vm77 = vcmp.ne.s32.totalorder %v69, 15
  %vm78 = vcmp.ne.s32.totalorder %v70, 15
  %v79 = vrot.slane %v14, 7
  %v80 = vrot.slane %v15, 7
  %v81 = vrot.slane %v16, 7
  %v82 = vrot.slane %v17, 7
  %vm83 = vcmp.lt.s32.totalorder %v19, 1
  %v84 = vsel %vm83, %v81, %v82
  %v85 = vsel %vm83, %v80, %v81
  %v86 = vsel %vm83, %v79, %v80
  %v87 = vsel %vm83, %v82, %v79
  %v88 = vsel %vm71, %v87, 0.0
  %v89 = vsel %vm72, %v86, 0.0
  %v90 = vsel %vm73, %v85, 0.0
  %v91 = vsel %vm74, %v84, 0.0
  %v92 = vrot.slane %v14, 1
  %v93 = vrot.slane %v15, 1
  %v94 = vrot.slane %v16, 1
  %v95 = vrot.slane %v17, 1
  %vm96 = vcmp.lt.s32.totalorder %v19, 7
  %v97 = vsel %vm96, %v94, %v95
  %v98 = vsel %vm96, %v93, %v94
  %v99 = vsel %vm96, %v92, %v93
  %v100 = vsel %vm96, %v95, %v92
  %v101 = vsel %vm75, %v99, 0.0
  %v102 = vsel %vm76, %v98, 0.0
  %v103 = vsel %vm77, %v97, 0.0
  %v104 = vsel %vm78, %v100, 0.0
  %v105 = vld [vmem:[%s2] sm:$0x1]
  %v106 = vld [vmem:[%s1] sm:$0xff]
  %v107 = vld [vmem:[%s1 + $0x8] sm:$0xff]
  %v108 = vld [vmem:[%s1 + $0x10] sm:$0xff]
  %v109 = vld [vmem:[%s1 + $0x18] sm:$0xff]
  %v110 = vld [vmem:[%s1 + $0x20] sm:$0xff]
  %v111 = vld [vmem:[%s1 + $0x28] sm:$0xff]
  %v112 = vld [vmem:[%s1 + $0x30] sm:$0xff]
  %v113 = vld [vmem:[%s1 + $0x38] sm:$0xff]
  %v114 = vld [vmem:[%s1 + $0x40] sm:$0xff]
  %v115 = vld [vmem:[%s1 + $0x48] sm:$0xff]
  %v116 = vld [vmem:[%s1 + $0x50] sm:$0xff]
  %v117 = vld [vmem:[%s1 + $0x58] sm:$0xff]
  %v118 = vld [vmem:[%s1 + $0x60] sm:$0xff]
  %v119 = vld [vmem:[%s1 + $0x68] sm:$0xff]
  %v120 = vld [vmem:[%s1 + $0x70] sm:$0xff]
  %v121 = vld [vmem:[%s1 + $0x78] sm:$0xff]
  %122 = vmatprep.subr.mxu0 0.0
  %123 = vmatpush1.msra.mxu0 %v106
  %124 = vmatprep.subr.mxu0 0.0
  %125 = vmatpush1.msra.mxu0 %v107
  %126 = vmatprep.subr.mxu0 0.0
  %127 = vmatpush1.msra.mxu0 %v108
  %128 = vmatprep.subr.mxu0 0.0
  %129 = vmatpush1.msra.mxu0 %v109
  %130 = vmatprep.subr.mxu0 0.0
  %131 = vmatpush1.msra.mxu0 %v110
  %132 = vmatprep.subr.mxu0 0.0
  %133 = vmatpush1.msra.mxu0 %v111
  %134 = vmatprep.subr.mxu0 0.0
  %135 = vmatpush1.msra.mxu0 %v112
  %136 = vmatprep.subr.mxu0 0.0
  %137 = vmatpush1.msra.mxu0 %v113
  %138 = vmatprep.subr.mxu0 0.0
  %139 = vmatpush1.msra.mxu0 %v114
  %140 = vmatprep.subr.mxu0 0.0
  %141 = vmatpush1.msra.mxu0 %v115
  %142 = vmatprep.subr.mxu0 0.0
  %143 = vmatpush1.msra.mxu0 %v116
  %144 = vmatprep.subr.mxu0 0.0
  %145 = vmatpush1.msra.mxu0 %v117
  %146 = vmatprep.subr.mxu0 0.0
  %147 = vmatpush1.msra.mxu0 %v118
  %148 = vmatprep.subr.mxu0 0.0
  %149 = vmatpush1.msra.mxu0 %v119
  %150 = vmatprep.subr.mxu0 0.0
  %151 = vmatpush1.msra.mxu0 %v120
  %152 = vmatprep.subr.mxu0 0.0
  %153 = vmatpush1.msra.mxu0 %v121
  %154 = vmatprep.subr.mxu0 0.0
  %155 = vmatpush1.msra.mxu0 0.0
  %156 = vmatprep.subr.mxu0 0.0
  %157 = vmatpush1.msra.mxu0 0.0
  %158 = vmatprep.subr.mxu0 0.0
  %159 = vmatpush1.msra.mxu0 0.0
  %160 = vmatprep.subr.mxu0 0.0
  %161 = vmatpush1.msra.mxu0 0.0
  %162 = vmatprep.subr.mxu0 0.0
  %163 = vmatpush1.msra.mxu0 0.0
  %164 = vmatprep.subr.mxu0 0.0
  %165 = vmatpush1.msra.mxu0 0.0
  %166 = vmatprep.subr.mxu0 0.0
  %167 = vmatpush1.msra.mxu0 0.0
  %168 = vmatprep.subr.mxu0 0.0
  %169 = vmatpush1.msra.mxu0 0.0
  %170 = vmatprep.subr.mxu0 0.0
  %171 = vmatpush1.msra.mxu0 0.0
  %172 = vmatprep.subr.mxu0 0.0
  %173 = vmatpush1.msra.mxu0 0.0
  %174 = vmatprep.subr.mxu0 0.0
  %175 = vmatpush1.msra.mxu0 0.0
  %176 = vmatprep.subr.mxu0 0.0
  %177 = vmatpush1.msra.mxu0 0.0
  %178 = vmatprep.subr.mxu0 0.0
  %179 = vmatpush1.msra.mxu0 0.0
  %180 = vmatprep.subr.mxu0 0.0
  %181 = vmatpush1.msra.mxu0 0.0
  %182 = vmatprep.subr.mxu0 0.0
  %183 = vmatpush1.msra.mxu0 0.0
  %184 = vmatprep.subr.mxu0 0.0
  %185 = vmatpush1.msra.mxu0 0.0
  %186 = vmatprep.mubr.f32.mxu0 0.0
  %187 = vmatmul.mubr.f32.gmra.mrb[0].mxu0 %v88
  %v188 = vpop.f32.mrb[0].mxu0
  %v189 = vadd.f32 0.0, %v188
  %v190 = vpop.f32.mrb[0].mxu0
  %191 = vmatprep.mubr.f32.mxu0 0.0
  %192 = vmatmul.mubr.f32.gmra.mrb[0].mxu0 %v89
  %v193 = vpop.f32.mrb[0].mxu0
  %v194 = vadd.f32 0.0, %v193
  %v195 = vpop.f32.mrb[0].mxu0
  %196 = vmatprep.mubr.f32.mxu0 0.0
  %197 = vmatmul.mubr.f32.gmra.mrb[0].mxu0 %v90
  %v198 = vpop.f32.mrb[0].mxu0
  %v199 = vadd.f32 0.0, %v198
  %v200 = vpop.f32.mrb[0].mxu0
  %201 = vmatprep.mubr.f32.mxu0 0.0
  %202 = vmatmul.mubr.f32.gmra.mrb[0].mxu0 %v91
  %v203 = vpop.f32.mrb[0].mxu0
  %v204 = vadd.f32 0.0, %v203
  %v205 = vpop.f32.mrb[0].mxu0
  %206 = vdwg.mxu0
  %v208 = vlaneseq
  %v209 = vshrl.u32 %v208, 7
  %v210 = vsub.s32 0, %v209
  %v211 = vrot.slane %v105, %v210
  %v213 = vadd.f32 %v211, %v189
  %v214 = vadd.f32 %v211, %v194
  %v215 = vadd.f32 %v211, %v199
  %v216 = vadd.f32 %v211, %v204
  %s217 = scalar_lea.vmem %s1, 128
  %v218 = vld [vmem:[%s217] sm:$0xff]
  %v219 = vld [vmem:[%s217 + $0x8] sm:$0xff]
  %v220 = vld [vmem:[%s217 + $0x10] sm:$0xff]
  %v221 = vld [vmem:[%s217 + $0x18] sm:$0xff]
  %v222 = vld [vmem:[%s217 + $0x20] sm:$0xff]
  %v223 = vld [vmem:[%s217 + $0x28] sm:$0xff]
  %v224 = vld [vmem:[%s217 + $0x30] sm:$0xff]
  %v225 = vld [vmem:[%s217 + $0x38] sm:$0xff]
  %v226 = vld [vmem:[%s217 + $0x40] sm:$0xff]
  %v227 = vld [vmem:[%s217 + $0x48] sm:$0xff]
  %v228 = vld [vmem:[%s217 + $0x50] sm:$0xff]
  %v229 = vld [vmem:[%s217 + $0x58] sm:$0xff]
  %v230 = vld [vmem:[%s217 + $0x60] sm:$0xff]
  %v231 = vld [vmem:[%s217 + $0x68] sm:$0xff]
  %v232 = vld [vmem:[%s217 + $0x70] sm:$0xff]
  %v233 = vld [vmem:[%s217 + $0x78] sm:$0xff]
  %234 = vmatprep.subr.mxu0 0.0
  %235 = vmatpush1.msra.mxu0 %v218
  %236 = vmatprep.subr.mxu0 0.0
  %237 = vmatpush1.msra.mxu0 %v219
  %238 = vmatprep.subr.mxu0 0.0
  %239 = vmatpush1.msra.mxu0 %v220
  %240 = vmatprep.subr.mxu0 0.0
  %241 = vmatpush1.msra.mxu0 %v221
  %242 = vmatprep.subr.mxu0 0.0
  %243 = vmatpush1.msra.mxu0 %v222
  %244 = vmatprep.subr.mxu0 0.0
  %245 = vmatpush1.msra.mxu0 %v223
  %246 = vmatprep.subr.mxu0 0.0
  %247 = vmatpush1.msra.mxu0 %v224
  %248 = vmatprep.subr.mxu0 0.0
  %249 = vmatpush1.msra.mxu0 %v225
  %250 = vmatprep.subr.mxu0 0.0
  %251 = vmatpush1.msra.mxu0 %v226
  %252 = vmatprep.subr.mxu0 0.0
  %253 = vmatpush1.msra.mxu0 %v227
  %254 = vmatprep.subr.mxu0 0.0
  %255 = vmatpush1.msra.mxu0 %v228
  %256 = vmatprep.subr.mxu0 0.0
  %257 = vmatpush1.msra.mxu0 %v229
  %258 = vmatprep.subr.mxu0 0.0
  %259 = vmatpush1.msra.mxu0 %v230
  %260 = vmatprep.subr.mxu0 0.0
  %261 = vmatpush1.msra.mxu0 %v231
  %262 = vmatprep.subr.mxu0 0.0
  %263 = vmatpush1.msra.mxu0 %v232
  %264 = vmatprep.subr.mxu0 0.0
  %265 = vmatpush1.msra.mxu0 %v233
  %266 = vmatprep.subr.mxu0 0.0
  %267 = vmatpush1.msra.mxu0 0.0
  %268 = vmatprep.subr.mxu0 0.0
  %269 = vmatpush1.msra.mxu0 0.0
  %270 = vmatprep.subr.mxu0 0.0
  %271 = vmatpush1.msra.mxu0 0.0
  %272 = vmatprep.subr.mxu0 0.0
  %273 = vmatpush1.msra.mxu0 0.0
  %274 = vmatprep.subr.mxu0 0.0
  %275 = vmatpush1.msra.mxu0 0.0
  %276 = vmatprep.subr.mxu0 0.0
  %277 = vmatpush1.msra.mxu0 0.0
  %278 = vmatprep.subr.mxu0 0.0
  %279 = vmatpush1.msra.mxu0 0.0
  %280 = vmatprep.subr.mxu0 0.0
  %281 = vmatpush1.msra.mxu0 0.0
  %282 = vmatprep.subr.mxu0 0.0
  %283 = vmatpush1.msra.mxu0 0.0
  %284 = vmatprep.subr.mxu0 0.0
  %285 = vmatpush1.msra.mxu0 0.0
  %286 = vmatprep.subr.mxu0 0.0
  %287 = vmatpush1.msra.mxu0 0.0
  %288 = vmatprep.subr.mxu0 0.0
  %289 = vmatpush1.msra.mxu0 0.0
  %290 = vmatprep.subr.mxu0 0.0
  %291 = vmatpush1.msra.mxu0 0.0
  %292 = vmatprep.subr.mxu0 0.0
  %293 = vmatpush1.msra.mxu0 0.0
  %294 = vmatprep.subr.mxu0 0.0
  %295 = vmatpush1.msra.mxu0 0.0
  %296 = vmatprep.subr.mxu0 0.0
  %297 = vmatpush1.msra.mxu0 0.0
  %298 = vmatprep.mubr.f32.mxu0 0.0
  %299 = vmatmul.mubr.f32.gmra.mrb[0].mxu0 %v14
  %v300 = vpop.f32.mrb[0].mxu0
  %v301 = vadd.f32 0.0, %v300
  %v302 = vpop.f32.mrb[0].mxu0
  %303 = vmatprep.mubr.f32.mxu0 0.0
  %304 = vmatmul.mubr.f32.gmra.mrb[0].mxu0 %v15
  %v305 = vpop.f32.mrb[0].mxu0
  %v306 = vadd.f32 0.0, %v305
  %v307 = vpop.f32.mrb[0].mxu0
  %308 = vmatprep.mubr.f32.mxu0 0.0
  %309 = vmatmul.mubr.f32.gmra.mrb[0].mxu0 %v16
  %v310 = vpop.f32.mrb[0].mxu0
  %v311 = vadd.f32 0.0, %v310
  %v312 = vpop.f32.mrb[0].mxu0
  %313 = vmatprep.mubr.f32.mxu0 0.0
  %314 = vmatmul.mubr.f32.gmra.mrb[0].mxu0 %v17
  %v315 = vpop.f32.mrb[0].mxu0
  %v316 = vadd.f32 0.0, %v315
  %v317 = vpop.f32.mrb[0].mxu0
  %318 = vdwg.mxu0
  %v319 = vadd.f32 %v213, %v301
  %v320 = vadd.f32 %v214, %v306
  %v321 = vadd.f32 %v215, %v311
  %v322 = vadd.f32 %v216, %v316
  %s323 = scalar_lea.vmem %s1, 256
  %v324 = vld [vmem:[%s323] sm:$0xff]
  %v325 = vld [vmem:[%s323 + $0x8] sm:$0xff]
  %v326 = vld [vmem:[%s323 + $0x10] sm:$0xff]
  %v327 = vld [vmem:[%s323 + $0x18] sm:$0xff]
  %v328 = vld [vmem:[%s323 + $0x20] sm:$0xff]
  %v329 = vld [vmem:[%s323 + $0x28] sm:$0xff]
  %v330 = vld [vmem:[%s323 + $0x30] sm:$0xff]
  %v331 = vld [vmem:[%s323 + $0x38] sm:$0xff]
  %v332 = vld [vmem:[%s323 + $0x40] sm:$0xff]
  %v333 = vld [vmem:[%s323 + $0x48] sm:$0xff]
  %v334 = vld [vmem:[%s323 + $0x50] sm:$0xff]
  %v335 = vld [vmem:[%s323 + $0x58] sm:$0xff]
  %v336 = vld [vmem:[%s323 + $0x60] sm:$0xff]
  %v337 = vld [vmem:[%s323 + $0x68] sm:$0xff]
  %v338 = vld [vmem:[%s323 + $0x70] sm:$0xff]
  %v339 = vld [vmem:[%s323 + $0x78] sm:$0xff]
  %340 = vmatprep.subr.mxu0 0.0
  %341 = vmatpush1.msra.mxu0 %v324
  %342 = vmatprep.subr.mxu0 0.0
  %343 = vmatpush1.msra.mxu0 %v325
  %344 = vmatprep.subr.mxu0 0.0
  %345 = vmatpush1.msra.mxu0 %v326
  %346 = vmatprep.subr.mxu0 0.0
  %347 = vmatpush1.msra.mxu0 %v327
  %348 = vmatprep.subr.mxu0 0.0
  %349 = vmatpush1.msra.mxu0 %v328
  %350 = vmatprep.subr.mxu0 0.0
  %351 = vmatpush1.msra.mxu0 %v329
  %352 = vmatprep.subr.mxu0 0.0
  %353 = vmatpush1.msra.mxu0 %v330
  %354 = vmatprep.subr.mxu0 0.0
  %355 = vmatpush1.msra.mxu0 %v331
  %356 = vmatprep.subr.mxu0 0.0
  %357 = vmatpush1.msra.mxu0 %v332
  %358 = vmatprep.subr.mxu0 0.0
  %359 = vmatpush1.msra.mxu0 %v333
  %360 = vmatprep.subr.mxu0 0.0
  %361 = vmatpush1.msra.mxu0 %v334
  %362 = vmatprep.subr.mxu0 0.0
  %363 = vmatpush1.msra.mxu0 %v335
  %364 = vmatprep.subr.mxu0 0.0
  %365 = vmatpush1.msra.mxu0 %v336
  %366 = vmatprep.subr.mxu0 0.0
  %367 = vmatpush1.msra.mxu0 %v337
  %368 = vmatprep.subr.mxu0 0.0
  %369 = vmatpush1.msra.mxu0 %v338
  %370 = vmatprep.subr.mxu0 0.0
  %371 = vmatpush1.msra.mxu0 %v339
  %372 = vmatprep.subr.mxu0 0.0
  %373 = vmatpush1.msra.mxu0 0.0
  %374 = vmatprep.subr.mxu0 0.0
  %375 = vmatpush1.msra.mxu0 0.0
  %376 = vmatprep.subr.mxu0 0.0
  %377 = vmatpush1.msra.mxu0 0.0
  %378 = vmatprep.subr.mxu0 0.0
  %379 = vmatpush1.msra.mxu0 0.0
  %380 = vmatprep.subr.mxu0 0.0
  %381 = vmatpush1.msra.mxu0 0.0
  %382 = vmatprep.subr.mxu0 0.0
  %383 = vmatpush1.msra.mxu0 0.0
  %384 = vmatprep.subr.mxu0 0.0
  %385 = vmatpush1.msra.mxu0 0.0
  %386 = vmatprep.subr.mxu0 0.0
  %387 = vmatpush1.msra.mxu0 0.0
  %388 = vmatprep.subr.mxu0 0.0
  %389 = vmatpush1.msra.mxu0 0.0
  %390 = vmatprep.subr.mxu0 0.0
  %391 = vmatpush1.msra.mxu0 0.0
  %392 = vmatprep.subr.mxu0 0.0
  %393 = vmatpush1.msra.mxu0 0.0
  %394 = vmatprep.subr.mxu0 0.0
  %395 = vmatpush1.msra.mxu0 0.0
  %396 = vmatprep.subr.mxu0 0.0
  %397 = vmatpush1.msra.mxu0 0.0
  %398 = vmatprep.subr.mxu0 0.0
  %399 = vmatpush1.msra.mxu0 0.0
  %400 = vmatprep.subr.mxu0 0.0
  %401 = vmatpush1.msra.mxu0 0.0
  %402 = vmatprep.subr.mxu0 0.0
  %403 = vmatpush1.msra.mxu0 0.0
  %404 = vmatprep.mubr.f32.mxu0 0.0
  %405 = vmatmul.mubr.f32.gmra.mrb[0].mxu0 %v101
  %v406 = vpop.f32.mrb[0].mxu0
  %v407 = vadd.f32 0.0, %v406
  %v408 = vpop.f32.mrb[0].mxu0
  %409 = vmatprep.mubr.f32.mxu0 0.0
  %410 = vmatmul.mubr.f32.gmra.mrb[0].mxu0 %v102
  %v411 = vpop.f32.mrb[0].mxu0
  %v412 = vadd.f32 0.0, %v411
  %v413 = vpop.f32.mrb[0].mxu0
  %414 = vmatprep.mubr.f32.mxu0 0.0
  %415 = vmatmul.mubr.f32.gmra.mrb[0].mxu0 %v103
  %v416 = vpop.f32.mrb[0].mxu0
  %v417 = vadd.f32 0.0, %v416
  %v418 = vpop.f32.mrb[0].mxu0
  %419 = vmatprep.mubr.f32.mxu0 0.0
  %420 = vmatmul.mubr.f32.gmra.mrb[0].mxu0 %v104
  %v421 = vpop.f32.mrb[0].mxu0
  %v422 = vadd.f32 0.0, %v421
  %v423 = vpop.f32.mrb[0].mxu0
  %424 = vdwg.mxu0
  %v425 = vadd.f32 %v319, %v407
  %v426 = vadd.f32 %v320, %v412
  %v427 = vadd.f32 %v321, %v417
  %v428 = vadd.f32 %v322, %v422
  %vm429 = vcmp.ge.f32.partialorder %v425, 0.0
  %vm430 = vcmp.ge.f32.partialorder %v426, 0.0
  %vm431 = vcmp.ge.f32.partialorder %v427, 0.0
  %vm432 = vcmp.ge.f32.partialorder %v428, 0.0
  %v433 = vmul.f32 %v425, 0.2
  %v434 = vmul.f32 %v426, 0.2
  %v435 = vmul.f32 %v427, 0.2
  %v436 = vmul.f32 %v428, 0.2
  %v437 = vsel %vm429, %v425, %v433
  %v438 = vsel %vm430, %v426, %v434
  %v439 = vsel %vm431, %v427, %v435
  %v440 = vsel %vm432, %v428, %v436
  %v441 = vrot.slane %v437, 7
  %v442 = vrot.slane %v438, 7
  %v443 = vrot.slane %v439, 7
  %v444 = vrot.slane %v440, 7
  %v445 = vsel %vm83, %v443, %v444
  %v446 = vsel %vm83, %v442, %v443
  %v447 = vsel %vm83, %v441, %v442
  %v448 = vsel %vm83, %v444, %v441
  %v449 = vsel %vm71, %v448, 0.0
  %v450 = vsel %vm72, %v447, 0.0
  %v451 = vsel %vm73, %v446, 0.0
  %v452 = vsel %vm74, %v445, 0.0
  %v453 = vrot.slane %v437, 1
  %v454 = vrot.slane %v438, 1
  %v455 = vrot.slane %v439, 1
  %v456 = vrot.slane %v440, 1
  %v457 = vsel %vm96, %v455, %v456
  %v458 = vsel %vm96, %v454, %v455
  %v459 = vsel %vm96, %v453, %v454
  %v460 = vsel %vm96, %v456, %v453
  %v461 = vsel %vm75, %v459, 0.0
  %v462 = vsel %vm76, %v458, 0.0
  %v463 = vsel %vm77, %v457, 0.0
  %v464 = vsel %vm78, %v460, 0.0
  %s465 = scalar_lea.vmem %s2, 1
  %v466 = vld [vmem:[%s465] sm:$0x1]
  %s467 = scalar_lea.vmem %s1, 384
  %v468 = vld [vmem:[%s467] sm:$0xff]
  %v469 = vld [vmem:[%s467 + $0x8] sm:$0xff]
  %v470 = vld [vmem:[%s467 + $0x10] sm:$0xff]
  %v471 = vld [vmem:[%s467 + $0x18] sm:$0xff]
  %v472 = vld [vmem:[%s467 + $0x20] sm:$0xff]
  %v473 = vld [vmem:[%s467 + $0x28] sm:$0xff]
  %v474 = vld [vmem:[%s467 + $0x30] sm:$0xff]
  %v475 = vld [vmem:[%s467 + $0x38] sm:$0xff]
  %v476 = vld [vmem:[%s467 + $0x40] sm:$0xff]
  %v477 = vld [vmem:[%s467 + $0x48] sm:$0xff]
  %v478 = vld [vmem:[%s467 + $0x50] sm:$0xff]
  %v479 = vld [vmem:[%s467 + $0x58] sm:$0xff]
  %v480 = vld [vmem:[%s467 + $0x60] sm:$0xff]
  %v481 = vld [vmem:[%s467 + $0x68] sm:$0xff]
  %v482 = vld [vmem:[%s467 + $0x70] sm:$0xff]
  %v483 = vld [vmem:[%s467 + $0x78] sm:$0xff]
  %484 = vmatprep.subr.mxu0 0.0
  %485 = vmatpush1.msra.mxu0 %v468
  %486 = vmatprep.subr.mxu0 0.0
  %487 = vmatpush1.msra.mxu0 %v469
  %488 = vmatprep.subr.mxu0 0.0
  %489 = vmatpush1.msra.mxu0 %v470
  %490 = vmatprep.subr.mxu0 0.0
  %491 = vmatpush1.msra.mxu0 %v471
  %492 = vmatprep.subr.mxu0 0.0
  %493 = vmatpush1.msra.mxu0 %v472
  %494 = vmatprep.subr.mxu0 0.0
  %495 = vmatpush1.msra.mxu0 %v473
  %496 = vmatprep.subr.mxu0 0.0
  %497 = vmatpush1.msra.mxu0 %v474
  %498 = vmatprep.subr.mxu0 0.0
  %499 = vmatpush1.msra.mxu0 %v475
  %500 = vmatprep.subr.mxu0 0.0
  %501 = vmatpush1.msra.mxu0 %v476
  %502 = vmatprep.subr.mxu0 0.0
  %503 = vmatpush1.msra.mxu0 %v477
  %504 = vmatprep.subr.mxu0 0.0
  %505 = vmatpush1.msra.mxu0 %v478
  %506 = vmatprep.subr.mxu0 0.0
  %507 = vmatpush1.msra.mxu0 %v479
  %508 = vmatprep.subr.mxu0 0.0
  %509 = vmatpush1.msra.mxu0 %v480
  %510 = vmatprep.subr.mxu0 0.0
  %511 = vmatpush1.msra.mxu0 %v481
  %512 = vmatprep.subr.mxu0 0.0
  %513 = vmatpush1.msra.mxu0 %v482
  %514 = vmatprep.subr.mxu0 0.0
  %515 = vmatpush1.msra.mxu0 %v483
  %516 = vmatprep.subr.mxu0 0.0
  %517 = vmatpush1.msra.mxu0 0.0
  %518 = vmatprep.subr.mxu0 0.0
  %519 = vmatpush1.msra.mxu0 0.0
  %520 = vmatprep.subr.mxu0 0.0
  %521 = vmatpush1.msra.mxu0 0.0
  %522 = vmatprep.subr.mxu0 0.0
  %523 = vmatpush1.msra.mxu0 0.0
  %524 = vmatprep.subr.mxu0 0.0
  %525 = vmatpush1.msra.mxu0 0.0
  %526 = vmatprep.subr.mxu0 0.0
  %527 = vmatpush1.msra.mxu0 0.0
  %528 = vmatprep.subr.mxu0 0.0
  %529 = vmatpush1.msra.mxu0 0.0
  %530 = vmatprep.subr.mxu0 0.0
  %531 = vmatpush1.msra.mxu0 0.0
  %532 = vmatprep.subr.mxu0 0.0
  %533 = vmatpush1.msra.mxu0 0.0
  %534 = vmatprep.subr.mxu0 0.0
  %535 = vmatpush1.msra.mxu0 0.0
  %536 = vmatprep.subr.mxu0 0.0
  %537 = vmatpush1.msra.mxu0 0.0
  %538 = vmatprep.subr.mxu0 0.0
  %539 = vmatpush1.msra.mxu0 0.0
  %540 = vmatprep.subr.mxu0 0.0
  %541 = vmatpush1.msra.mxu0 0.0
  %542 = vmatprep.subr.mxu0 0.0
  %543 = vmatpush1.msra.mxu0 0.0
  %544 = vmatprep.subr.mxu0 0.0
  %545 = vmatpush1.msra.mxu0 0.0
  %546 = vmatprep.subr.mxu0 0.0
  %547 = vmatpush1.msra.mxu0 0.0
  %548 = vmatprep.mubr.f32.mxu0 0.0
  %549 = vmatmul.mubr.f32.gmra.mrb[0].mxu0 %v449
  %v550 = vpop.f32.mrb[0].mxu0
  %v551 = vadd.f32 0.0, %v550
  %v552 = vpop.f32.mrb[0].mxu0
  %553 = vmatprep.mubr.f32.mxu0 0.0
  %554 = vmatmul.mubr.f32.gmra.mrb[0].mxu0 %v450
  %v555 = vpop.f32.mrb[0].mxu0
  %v556 = vadd.f32 0.0, %v555
  %v557 = vpop.f32.mrb[0].mxu0
  %558 = vmatprep.mubr.f32.mxu0 0.0
  %559 = vmatmul.mubr.f32.gmra.mrb[0].mxu0 %v451
  %v560 = vpop.f32.mrb[0].mxu0
  %v561 = vadd.f32 0.0, %v560
  %v562 = vpop.f32.mrb[0].mxu0
  %563 = vmatprep.mubr.f32.mxu0 0.0
  %564 = vmatmul.mubr.f32.gmra.mrb[0].mxu0 %v452
  %v565 = vpop.f32.mrb[0].mxu0
  %v566 = vadd.f32 0.0, %v565
  %v567 = vpop.f32.mrb[0].mxu0
  %568 = vdwg.mxu0
  %v570 = vlaneseq
  %v571 = vshrl.u32 %v570, 7
  %v572 = vsub.s32 0, %v571
  %v573 = vrot.slane %v466, %v572
  %v575 = vadd.f32 %v573, %v551
  %v576 = vadd.f32 %v573, %v556
  %v577 = vadd.f32 %v573, %v561
  %v578 = vadd.f32 %v573, %v566
  %s579 = scalar_lea.vmem %s1, 512
  %v580 = vld [vmem:[%s579] sm:$0xff]
  %v581 = vld [vmem:[%s579 + $0x8] sm:$0xff]
  %v582 = vld [vmem:[%s579 + $0x10] sm:$0xff]
  %v583 = vld [vmem:[%s579 + $0x18] sm:$0xff]
  %v584 = vld [vmem:[%s579 + $0x20] sm:$0xff]
  %v585 = vld [vmem:[%s579 + $0x28] sm:$0xff]
  %v586 = vld [vmem:[%s579 + $0x30] sm:$0xff]
  %v587 = vld [vmem:[%s579 + $0x38] sm:$0xff]
  %v588 = vld [vmem:[%s579 + $0x40] sm:$0xff]
  %v589 = vld [vmem:[%s579 + $0x48] sm:$0xff]
  %v590 = vld [vmem:[%s579 + $0x50] sm:$0xff]
  %v591 = vld [vmem:[%s579 + $0x58] sm:$0xff]
  %v592 = vld [vmem:[%s579 + $0x60] sm:$0xff]
  %v593 = vld [vmem:[%s579 + $0x68] sm:$0xff]
  %v594 = vld [vmem:[%s579 + $0x70] sm:$0xff]
  %v595 = vld [vmem:[%s579 + $0x78] sm:$0xff]
  %596 = vmatprep.subr.mxu0 0.0
  %597 = vmatpush1.msra.mxu0 %v580
  %598 = vmatprep.subr.mxu0 0.0
  %599 = vmatpush1.msra.mxu0 %v581
  %600 = vmatprep.subr.mxu0 0.0
  %601 = vmatpush1.msra.mxu0 %v582
  %602 = vmatprep.subr.mxu0 0.0
  %603 = vmatpush1.msra.mxu0 %v583
  %604 = vmatprep.subr.mxu0 0.0
  %605 = vmatpush1.msra.mxu0 %v584
  %606 = vmatprep.subr.mxu0 0.0
  %607 = vmatpush1.msra.mxu0 %v585
  %608 = vmatprep.subr.mxu0 0.0
  %609 = vmatpush1.msra.mxu0 %v586
  %610 = vmatprep.subr.mxu0 0.0
  %611 = vmatpush1.msra.mxu0 %v587
  %612 = vmatprep.subr.mxu0 0.0
  %613 = vmatpush1.msra.mxu0 %v588
  %614 = vmatprep.subr.mxu0 0.0
  %615 = vmatpush1.msra.mxu0 %v589
  %616 = vmatprep.subr.mxu0 0.0
  %617 = vmatpush1.msra.mxu0 %v590
  %618 = vmatprep.subr.mxu0 0.0
  %619 = vmatpush1.msra.mxu0 %v591
  %620 = vmatprep.subr.mxu0 0.0
  %621 = vmatpush1.msra.mxu0 %v592
  %622 = vmatprep.subr.mxu0 0.0
  %623 = vmatpush1.msra.mxu0 %v593
  %624 = vmatprep.subr.mxu0 0.0
  %625 = vmatpush1.msra.mxu0 %v594
  %626 = vmatprep.subr.mxu0 0.0
  %627 = vmatpush1.msra.mxu0 %v595
  %628 = vmatprep.subr.mxu0 0.0
  %629 = vmatpush1.msra.mxu0 0.0
  %630 = vmatprep.subr.mxu0 0.0
  %631 = vmatpush1.msra.mxu0 0.0
  %632 = vmatprep.subr.mxu0 0.0
  %633 = vmatpush1.msra.mxu0 0.0
  %634 = vmatprep.subr.mxu0 0.0
  %635 = vmatpush1.msra.mxu0 0.0
  %636 = vmatprep.subr.mxu0 0.0
  %637 = vmatpush1.msra.mxu0 0.0
  %638 = vmatprep.subr.mxu0 0.0
  %639 = vmatpush1.msra.mxu0 0.0
  %640 = vmatprep.subr.mxu0 0.0
  %641 = vmatpush1.msra.mxu0 0.0
  %642 = vmatprep.subr.mxu0 0.0
  %643 = vmatpush1.msra.mxu0 0.0
  %644 = vmatprep.subr.mxu0 0.0
  %645 = vmatpush1.msra.mxu0 0.0
  %646 = vmatprep.subr.mxu0 0.0
  %647 = vmatpush1.msra.mxu0 0.0
  %648 = vmatprep.subr.mxu0 0.0
  %649 = vmatpush1.msra.mxu0 0.0
  %650 = vmatprep.subr.mxu0 0.0
  %651 = vmatpush1.msra.mxu0 0.0
  %652 = vmatprep.subr.mxu0 0.0
  %653 = vmatpush1.msra.mxu0 0.0
  %654 = vmatprep.subr.mxu0 0.0
  %655 = vmatpush1.msra.mxu0 0.0
  %656 = vmatprep.subr.mxu0 0.0
  %657 = vmatpush1.msra.mxu0 0.0
  %658 = vmatprep.subr.mxu0 0.0
  %659 = vmatpush1.msra.mxu0 0.0
  %660 = vmatprep.mubr.f32.mxu0 0.0
  %661 = vmatmul.mubr.f32.gmra.mrb[0].mxu0 %v437
  %v662 = vpop.f32.mrb[0].mxu0
  %v663 = vadd.f32 0.0, %v662
  %v664 = vpop.f32.mrb[0].mxu0
  %665 = vmatprep.mubr.f32.mxu0 0.0
  %666 = vmatmul.mubr.f32.gmra.mrb[0].mxu0 %v438
  %v667 = vpop.f32.mrb[0].mxu0
  %v668 = vadd.f32 0.0, %v667
  %v669 = vpop.f32.mrb[0].mxu0
  %670 = vmatprep.mubr.f32.mxu0 0.0
  %671 = vmatmul.mubr.f32.gmra.mrb[0].mxu0 %v439
  %v672 = vpop.f32.mrb[0].mxu0
  %v673 = vadd.f32 0.0, %v672
  %v674 = vpop.f32.mrb[0].mxu0
  %675 = vmatprep.mubr.f32.mxu0 0.0
  %676 = vmatmul.mubr.f32.gmra.mrb[0].mxu0 %v440
  %v677 = vpop.f32.mrb[0].mxu0
  %v678 = vadd.f32 0.0, %v677
  %v679 = vpop.f32.mrb[0].mxu0
  %680 = vdwg.mxu0
  %v681 = vadd.f32 %v575, %v663
  %v682 = vadd.f32 %v576, %v668
  %v683 = vadd.f32 %v577, %v673
  %v684 = vadd.f32 %v578, %v678
  %s685 = scalar_lea.vmem %s1, 640
  %v686 = vld [vmem:[%s685] sm:$0xff]
  %v687 = vld [vmem:[%s685 + $0x8] sm:$0xff]
  %v688 = vld [vmem:[%s685 + $0x10] sm:$0xff]
  %v689 = vld [vmem:[%s685 + $0x18] sm:$0xff]
  %v690 = vld [vmem:[%s685 + $0x20] sm:$0xff]
  %v691 = vld [vmem:[%s685 + $0x28] sm:$0xff]
  %v692 = vld [vmem:[%s685 + $0x30] sm:$0xff]
  %v693 = vld [vmem:[%s685 + $0x38] sm:$0xff]
  %v694 = vld [vmem:[%s685 + $0x40] sm:$0xff]
  %v695 = vld [vmem:[%s685 + $0x48] sm:$0xff]
  %v696 = vld [vmem:[%s685 + $0x50] sm:$0xff]
  %v697 = vld [vmem:[%s685 + $0x58] sm:$0xff]
  %v698 = vld [vmem:[%s685 + $0x60] sm:$0xff]
  %v699 = vld [vmem:[%s685 + $0x68] sm:$0xff]
  %v700 = vld [vmem:[%s685 + $0x70] sm:$0xff]
  %v701 = vld [vmem:[%s685 + $0x78] sm:$0xff]
  %702 = vmatprep.subr.mxu0 0.0
  %703 = vmatpush1.msra.mxu0 %v686
  %704 = vmatprep.subr.mxu0 0.0
  %705 = vmatpush1.msra.mxu0 %v687
  %706 = vmatprep.subr.mxu0 0.0
  %707 = vmatpush1.msra.mxu0 %v688
  %708 = vmatprep.subr.mxu0 0.0
  %709 = vmatpush1.msra.mxu0 %v689
  %710 = vmatprep.subr.mxu0 0.0
  %711 = vmatpush1.msra.mxu0 %v690
  %712 = vmatprep.subr.mxu0 0.0
  %713 = vmatpush1.msra.mxu0 %v691
  %714 = vmatprep.subr.mxu0 0.0
  %715 = vmatpush1.msra.mxu0 %v692
  %716 = vmatprep.subr.mxu0 0.0
  %717 = vmatpush1.msra.mxu0 %v693
  %718 = vmatprep.subr.mxu0 0.0
  %719 = vmatpush1.msra.mxu0 %v694
  %720 = vmatprep.subr.mxu0 0.0
  %721 = vmatpush1.msra.mxu0 %v695
  %722 = vmatprep.subr.mxu0 0.0
  %723 = vmatpush1.msra.mxu0 %v696
  %724 = vmatprep.subr.mxu0 0.0
  %725 = vmatpush1.msra.mxu0 %v697
  %726 = vmatprep.subr.mxu0 0.0
  %727 = vmatpush1.msra.mxu0 %v698
  %728 = vmatprep.subr.mxu0 0.0
  %729 = vmatpush1.msra.mxu0 %v699
  %730 = vmatprep.subr.mxu0 0.0
  %731 = vmatpush1.msra.mxu0 %v700
  %732 = vmatprep.subr.mxu0 0.0
  %733 = vmatpush1.msra.mxu0 %v701
  %734 = vmatprep.subr.mxu0 0.0
  %735 = vmatpush1.msra.mxu0 0.0
  %736 = vmatprep.subr.mxu0 0.0
  %737 = vmatpush1.msra.mxu0 0.0
  %738 = vmatprep.subr.mxu0 0.0
  %739 = vmatpush1.msra.mxu0 0.0
  %740 = vmatprep.subr.mxu0 0.0
  %741 = vmatpush1.msra.mxu0 0.0
  %742 = vmatprep.subr.mxu0 0.0
  %743 = vmatpush1.msra.mxu0 0.0
  %744 = vmatprep.subr.mxu0 0.0
  %745 = vmatpush1.msra.mxu0 0.0
  %746 = vmatprep.subr.mxu0 0.0
  %747 = vmatpush1.msra.mxu0 0.0
  %748 = vmatprep.subr.mxu0 0.0
  %749 = vmatpush1.msra.mxu0 0.0
  %750 = vmatprep.subr.mxu0 0.0
  %751 = vmatpush1.msra.mxu0 0.0
  %752 = vmatprep.subr.mxu0 0.0
  %753 = vmatpush1.msra.mxu0 0.0
  %754 = vmatprep.subr.mxu0 0.0
  %755 = vmatpush1.msra.mxu0 0.0
  %756 = vmatprep.subr.mxu0 0.0
  %757 = vmatpush1.msra.mxu0 0.0
  %758 = vmatprep.subr.mxu0 0.0
  %759 = vmatpush1.msra.mxu0 0.0
  %760 = vmatprep.subr.mxu0 0.0
  %761 = vmatpush1.msra.mxu0 0.0
  %762 = vmatprep.subr.mxu0 0.0
  %763 = vmatpush1.msra.mxu0 0.0
  %764 = vmatprep.subr.mxu0 0.0
  %765 = vmatpush1.msra.mxu0 0.0
  %766 = vmatprep.mubr.f32.mxu0 0.0
  %767 = vmatmul.mubr.f32.gmra.mrb[0].mxu0 %v461
  %v768 = vpop.f32.mrb[0].mxu0
  %v769 = vadd.f32 0.0, %v768
  %v770 = vpop.f32.mrb[0].mxu0
  %771 = vmatprep.mubr.f32.mxu0 0.0
  %772 = vmatmul.mubr.f32.gmra.mrb[0].mxu0 %v462
  %v773 = vpop.f32.mrb[0].mxu0
  %v774 = vadd.f32 0.0, %v773
  %v775 = vpop.f32.mrb[0].mxu0
  %776 = vmatprep.mubr.f32.mxu0 0.0
  %777 = vmatmul.mubr.f32.gmra.mrb[0].mxu0 %v463
  %v778 = vpop.f32.mrb[0].mxu0
  %v779 = vadd.f32 0.0, %v778
  %v780 = vpop.f32.mrb[0].mxu0
  %781 = vmatprep.mubr.f32.mxu0 0.0
  %782 = vmatmul.mubr.f32.gmra.mrb[0].mxu0 %v464
  %v783 = vpop.f32.mrb[0].mxu0
  %v784 = vadd.f32 0.0, %v783
  %v785 = vpop.f32.mrb[0].mxu0
  %786 = vdwg.mxu0
  %v787 = vadd.f32 %v681, %v769
  %v788 = vadd.f32 %v682, %v774
  %v789 = vadd.f32 %v683, %v779
  %v790 = vadd.f32 %v684, %v784
  %vm791 = vcmp.ge.f32.partialorder %v787, 0.0
  %vm792 = vcmp.ge.f32.partialorder %v788, 0.0
  %vm793 = vcmp.ge.f32.partialorder %v789, 0.0
  %vm794 = vcmp.ge.f32.partialorder %v790, 0.0
  %v795 = vmul.f32 %v787, 0.2
  %v796 = vmul.f32 %v788, 0.2
  %v797 = vmul.f32 %v789, 0.2
  %v798 = vmul.f32 %v790, 0.2
  %v799 = vsel %vm791, %v787, %v795
  %v800 = vsel %vm792, %v788, %v796
  %v801 = vsel %vm793, %v789, %v797
  %v802 = vsel %vm794, %v790, %v798
  %v803 = vrot.slane %v799, 7
  %v804 = vrot.slane %v800, 7
  %v805 = vrot.slane %v801, 7
  %v806 = vrot.slane %v802, 7
  %v807 = vsel %vm83, %v805, %v806
  %v808 = vsel %vm83, %v804, %v805
  %v809 = vsel %vm83, %v803, %v804
  %v810 = vsel %vm83, %v806, %v803
  %v811 = vsel %vm71, %v810, 0.0
  %v812 = vsel %vm72, %v809, 0.0
  %v813 = vsel %vm73, %v808, 0.0
  %v814 = vsel %vm74, %v807, 0.0
  %v815 = vrot.slane %v799, 1
  %v816 = vrot.slane %v800, 1
  %v817 = vrot.slane %v801, 1
  %v818 = vrot.slane %v802, 1
  %v819 = vsel %vm96, %v817, %v818
  %v820 = vsel %vm96, %v816, %v817
  %v821 = vsel %vm96, %v815, %v816
  %v822 = vsel %vm96, %v818, %v815
  %v823 = vsel %vm75, %v821, 0.0
  %v824 = vsel %vm76, %v820, 0.0
  %v825 = vsel %vm77, %v819, 0.0
  %v826 = vsel %vm78, %v822, 0.0
  %s827 = scalar_lea.vmem %s2, 2
  %v828 = vld [vmem:[%s827] sm:$0x1]
  %s829 = scalar_lea.vmem %s1, 768
  %v830 = vld [vmem:[%s829] sm:$0xff]
  %v831 = vld [vmem:[%s829 + $0x8] sm:$0xff]
  %v832 = vld [vmem:[%s829 + $0x10] sm:$0xff]
  %v833 = vld [vmem:[%s829 + $0x18] sm:$0xff]
  %v834 = vld [vmem:[%s829 + $0x20] sm:$0xff]
  %v835 = vld [vmem:[%s829 + $0x28] sm:$0xff]
  %v836 = vld [vmem:[%s829 + $0x30] sm:$0xff]
  %v837 = vld [vmem:[%s829 + $0x38] sm:$0xff]
  %v838 = vld [vmem:[%s829 + $0x40] sm:$0xff]
  %v839 = vld [vmem:[%s829 + $0x48] sm:$0xff]
  %v840 = vld [vmem:[%s829 + $0x50] sm:$0xff]
  %v841 = vld [vmem:[%s829 + $0x58] sm:$0xff]
  %v842 = vld [vmem:[%s829 + $0x60] sm:$0xff]
  %v843 = vld [vmem:[%s829 + $0x68] sm:$0xff]
  %v844 = vld [vmem:[%s829 + $0x70] sm:$0xff]
  %v845 = vld [vmem:[%s829 + $0x78] sm:$0xff]
  %846 = vmatprep.subr.mxu0 0.0
  %847 = vmatpush1.msra.mxu0 %v830
  %848 = vmatprep.subr.mxu0 0.0
  %849 = vmatpush1.msra.mxu0 %v831
  %850 = vmatprep.subr.mxu0 0.0
  %851 = vmatpush1.msra.mxu0 %v832
  %852 = vmatprep.subr.mxu0 0.0
  %853 = vmatpush1.msra.mxu0 %v833
  %854 = vmatprep.subr.mxu0 0.0
  %855 = vmatpush1.msra.mxu0 %v834
  %856 = vmatprep.subr.mxu0 0.0
  %857 = vmatpush1.msra.mxu0 %v835
  %858 = vmatprep.subr.mxu0 0.0
  %859 = vmatpush1.msra.mxu0 %v836
  %860 = vmatprep.subr.mxu0 0.0
  %861 = vmatpush1.msra.mxu0 %v837
  %862 = vmatprep.subr.mxu0 0.0
  %863 = vmatpush1.msra.mxu0 %v838
  %864 = vmatprep.subr.mxu0 0.0
  %865 = vmatpush1.msra.mxu0 %v839
  %866 = vmatprep.subr.mxu0 0.0
  %867 = vmatpush1.msra.mxu0 %v840
  %868 = vmatprep.subr.mxu0 0.0
  %869 = vmatpush1.msra.mxu0 %v841
  %870 = vmatprep.subr.mxu0 0.0
  %871 = vmatpush1.msra.mxu0 %v842
  %872 = vmatprep.subr.mxu0 0.0
  %873 = vmatpush1.msra.mxu0 %v843
  %874 = vmatprep.subr.mxu0 0.0
  %875 = vmatpush1.msra.mxu0 %v844
  %876 = vmatprep.subr.mxu0 0.0
  %877 = vmatpush1.msra.mxu0 %v845
  %878 = vmatprep.subr.mxu0 0.0
  %879 = vmatpush1.msra.mxu0 0.0
  %880 = vmatprep.subr.mxu0 0.0
  %881 = vmatpush1.msra.mxu0 0.0
  %882 = vmatprep.subr.mxu0 0.0
  %883 = vmatpush1.msra.mxu0 0.0
  %884 = vmatprep.subr.mxu0 0.0
  %885 = vmatpush1.msra.mxu0 0.0
  %886 = vmatprep.subr.mxu0 0.0
  %887 = vmatpush1.msra.mxu0 0.0
  %888 = vmatprep.subr.mxu0 0.0
  %889 = vmatpush1.msra.mxu0 0.0
  %890 = vmatprep.subr.mxu0 0.0
  %891 = vmatpush1.msra.mxu0 0.0
  %892 = vmatprep.subr.mxu0 0.0
  %893 = vmatpush1.msra.mxu0 0.0
  %894 = vmatprep.subr.mxu0 0.0
  %895 = vmatpush1.msra.mxu0 0.0
  %896 = vmatprep.subr.mxu0 0.0
  %897 = vmatpush1.msra.mxu0 0.0
  %898 = vmatprep.subr.mxu0 0.0
  %899 = vmatpush1.msra.mxu0 0.0
  %900 = vmatprep.subr.mxu0 0.0
  %901 = vmatpush1.msra.mxu0 0.0
  %902 = vmatprep.subr.mxu0 0.0
  %903 = vmatpush1.msra.mxu0 0.0
  %904 = vmatprep.subr.mxu0 0.0
  %905 = vmatpush1.msra.mxu0 0.0
  %906 = vmatprep.subr.mxu0 0.0
  %907 = vmatpush1.msra.mxu0 0.0
  %908 = vmatprep.subr.mxu0 0.0
  %909 = vmatpush1.msra.mxu0 0.0
  %910 = vmatprep.mubr.f32.mxu0 0.0
  %911 = vmatmul.mubr.f32.gmra.mrb[0].mxu0 %v811
  %v912 = vpop.f32.mrb[0].mxu0
  %v913 = vadd.f32 0.0, %v912
  %v914 = vpop.f32.mrb[0].mxu0
  %915 = vmatprep.mubr.f32.mxu0 0.0
  %916 = vmatmul.mubr.f32.gmra.mrb[0].mxu0 %v812
  %v917 = vpop.f32.mrb[0].mxu0
  %v918 = vadd.f32 0.0, %v917
  %v919 = vpop.f32.mrb[0].mxu0
  %920 = vmatprep.mubr.f32.mxu0 0.0
  %921 = vmatmul.mubr.f32.gmra.mrb[0].mxu0 %v813
  %v922 = vpop.f32.mrb[0].mxu0
  %v923 = vadd.f32 0.0, %v922
  %v924 = vpop.f32.mrb[0].mxu0
  %925 = vmatprep.mubr.f32.mxu0 0.0
  %926 = vmatmul.mubr.f32.gmra.mrb[0].mxu0 %v814
  %v927 = vpop.f32.mrb[0].mxu0
  %v928 = vadd.f32 0.0, %v927
  %v929 = vpop.f32.mrb[0].mxu0
  %930 = vdwg.mxu0
  %v932 = vlaneseq
  %v933 = vshrl.u32 %v932, 7
  %v934 = vsub.s32 0, %v933
  %v935 = vrot.slane %v828, %v934
  %v937 = vadd.f32 %v935, %v913
  %v938 = vadd.f32 %v935, %v918
  %v939 = vadd.f32 %v935, %v923
  %v940 = vadd.f32 %v935, %v928
  %s941 = scalar_lea.vmem %s1, 896
  %v942 = vld [vmem:[%s941] sm:$0xff]
  %v943 = vld [vmem:[%s941 + $0x8] sm:$0xff]
  %v944 = vld [vmem:[%s941 + $0x10] sm:$0xff]
  %v945 = vld [vmem:[%s941 + $0x18] sm:$0xff]
  %v946 = vld [vmem:[%s941 + $0x20] sm:$0xff]
  %v947 = vld [vmem:[%s941 + $0x28] sm:$0xff]
  %v948 = vld [vmem:[%s941 + $0x30] sm:$0xff]
  %v949 = vld [vmem:[%s941 + $0x38] sm:$0xff]
  %v950 = vld [vmem:[%s941 + $0x40] sm:$0xff]
  %v951 = vld [vmem:[%s941 + $0x48] sm:$0xff]
  %v952 = vld [vmem:[%s941 + $0x50] sm:$0xff]
  %v953 = vld [vmem:[%s941 + $0x58] sm:$0xff]
  %v954 = vld [vmem:[%s941 + $0x60] sm:$0xff]
  %v955 = vld [vmem:[%s941 + $0x68] sm:$0xff]
  %v956 = vld [vmem:[%s941 + $0x70] sm:$0xff]
  %v957 = vld [vmem:[%s941 + $0x78] sm:$0xff]
  %958 = vmatprep.subr.mxu0 0.0
  %959 = vmatpush1.msra.mxu0 %v942
  %960 = vmatprep.subr.mxu0 0.0
  %961 = vmatpush1.msra.mxu0 %v943
  %962 = vmatprep.subr.mxu0 0.0
  %963 = vmatpush1.msra.mxu0 %v944
  %964 = vmatprep.subr.mxu0 0.0
  %965 = vmatpush1.msra.mxu0 %v945
  %966 = vmatprep.subr.mxu0 0.0
  %967 = vmatpush1.msra.mxu0 %v946
  %968 = vmatprep.subr.mxu0 0.0
  %969 = vmatpush1.msra.mxu0 %v947
  %970 = vmatprep.subr.mxu0 0.0
  %971 = vmatpush1.msra.mxu0 %v948
  %972 = vmatprep.subr.mxu0 0.0
  %973 = vmatpush1.msra.mxu0 %v949
  %974 = vmatprep.subr.mxu0 0.0
  %975 = vmatpush1.msra.mxu0 %v950
  %976 = vmatprep.subr.mxu0 0.0
  %977 = vmatpush1.msra.mxu0 %v951
  %978 = vmatprep.subr.mxu0 0.0
  %979 = vmatpush1.msra.mxu0 %v952
  %980 = vmatprep.subr.mxu0 0.0
  %981 = vmatpush1.msra.mxu0 %v953
  %982 = vmatprep.subr.mxu0 0.0
  %983 = vmatpush1.msra.mxu0 %v954
  %984 = vmatprep.subr.mxu0 0.0
  %985 = vmatpush1.msra.mxu0 %v955
  %986 = vmatprep.subr.mxu0 0.0
  %987 = vmatpush1.msra.mxu0 %v956
  %988 = vmatprep.subr.mxu0 0.0
  %989 = vmatpush1.msra.mxu0 %v957
  %990 = vmatprep.subr.mxu0 0.0
  %991 = vmatpush1.msra.mxu0 0.0
  %992 = vmatprep.subr.mxu0 0.0
  %993 = vmatpush1.msra.mxu0 0.0
  %994 = vmatprep.subr.mxu0 0.0
  %995 = vmatpush1.msra.mxu0 0.0
  %996 = vmatprep.subr.mxu0 0.0
  %997 = vmatpush1.msra.mxu0 0.0
  %998 = vmatprep.subr.mxu0 0.0
  %999 = vmatpush1.msra.mxu0 0.0
  %1000 = vmatprep.subr.mxu0 0.0
  %1001 = vmatpush1.msra.mxu0 0.0
  %1002 = vmatprep.subr.mxu0 0.0
  %1003 = vmatpush1.msra.mxu0 0.0
  %1004 = vmatprep.subr.mxu0 0.0
  %1005 = vmatpush1.msra.mxu0 0.0
  %1006 = vmatprep.subr.mxu0 0.0
  %1007 = vmatpush1.msra.mxu0 0.0
  %1008 = vmatprep.subr.mxu0 0.0
  %1009 = vmatpush1.msra.mxu0 0.0
  %1010 = vmatprep.subr.mxu0 0.0
  %1011 = vmatpush1.msra.mxu0 0.0
  %1012 = vmatprep.subr.mxu0 0.0
  %1013 = vmatpush1.msra.mxu0 0.0
  %1014 = vmatprep.subr.mxu0 0.0
  %1015 = vmatpush1.msra.mxu0 0.0
  %1016 = vmatprep.subr.mxu0 0.0
  %1017 = vmatpush1.msra.mxu0 0.0
  %1018 = vmatprep.subr.mxu0 0.0
  %1019 = vmatpush1.msra.mxu0 0.0
  %1020 = vmatprep.subr.mxu0 0.0
  %1021 = vmatpush1.msra.mxu0 0.0
  %1022 = vmatprep.mubr.f32.mxu0 0.0
  %1023 = vmatmul.mubr.f32.gmra.mrb[0].mxu0 %v799
  %v1024 = vpop.f32.mrb[0].mxu0
  %v1025 = vadd.f32 0.0, %v1024
  %v1026 = vpop.f32.mrb[0].mxu0
  %1027 = vmatprep.mubr.f32.mxu0 0.0
  %1028 = vmatmul.mubr.f32.gmra.mrb[0].mxu0 %v800
  %v1029 = vpop.f32.mrb[0].mxu0
  %v1030 = vadd.f32 0.0, %v1029
  %v1031 = vpop.f32.mrb[0].mxu0
  %1032 = vmatprep.mubr.f32.mxu0 0.0
  %1033 = vmatmul.mubr.f32.gmra.mrb[0].mxu0 %v801
  %v1034 = vpop.f32.mrb[0].mxu0
  %v1035 = vadd.f32 0.0, %v1034
  %v1036 = vpop.f32.mrb[0].mxu0
  %1037 = vmatprep.mubr.f32.mxu0 0.0
  %1038 = vmatmul.mubr.f32.gmra.mrb[0].mxu0 %v802
  %v1039 = vpop.f32.mrb[0].mxu0
  %v1040 = vadd.f32 0.0, %v1039
  %v1041 = vpop.f32.mrb[0].mxu0
  %1042 = vdwg.mxu0
  %v1043 = vadd.f32 %v937, %v1025
  %v1044 = vadd.f32 %v938, %v1030
  %v1045 = vadd.f32 %v939, %v1035
  %v1046 = vadd.f32 %v940, %v1040
  %s1047 = scalar_lea.vmem %s1, 1024
  %v1048 = vld [vmem:[%s1047] sm:$0xff]
  %v1049 = vld [vmem:[%s1047 + $0x8] sm:$0xff]
  %v1050 = vld [vmem:[%s1047 + $0x10] sm:$0xff]
  %v1051 = vld [vmem:[%s1047 + $0x18] sm:$0xff]
  %v1052 = vld [vmem:[%s1047 + $0x20] sm:$0xff]
  %v1053 = vld [vmem:[%s1047 + $0x28] sm:$0xff]
  %v1054 = vld [vmem:[%s1047 + $0x30] sm:$0xff]
  %v1055 = vld [vmem:[%s1047 + $0x38] sm:$0xff]
  %v1056 = vld [vmem:[%s1047 + $0x40] sm:$0xff]
  %v1057 = vld [vmem:[%s1047 + $0x48] sm:$0xff]
  %v1058 = vld [vmem:[%s1047 + $0x50] sm:$0xff]
  %v1059 = vld [vmem:[%s1047 + $0x58] sm:$0xff]
  %v1060 = vld [vmem:[%s1047 + $0x60] sm:$0xff]
  %v1061 = vld [vmem:[%s1047 + $0x68] sm:$0xff]
  %v1062 = vld [vmem:[%s1047 + $0x70] sm:$0xff]
  %v1063 = vld [vmem:[%s1047 + $0x78] sm:$0xff]
  %1064 = vmatprep.subr.mxu0 0.0
  %1065 = vmatpush1.msra.mxu0 %v1048
  %1066 = vmatprep.subr.mxu0 0.0
  %1067 = vmatpush1.msra.mxu0 %v1049
  %1068 = vmatprep.subr.mxu0 0.0
  %1069 = vmatpush1.msra.mxu0 %v1050
  %1070 = vmatprep.subr.mxu0 0.0
  %1071 = vmatpush1.msra.mxu0 %v1051
  %1072 = vmatprep.subr.mxu0 0.0
  %1073 = vmatpush1.msra.mxu0 %v1052
  %1074 = vmatprep.subr.mxu0 0.0
  %1075 = vmatpush1.msra.mxu0 %v1053
  %1076 = vmatprep.subr.mxu0 0.0
  %1077 = vmatpush1.msra.mxu0 %v1054
  %1078 = vmatprep.subr.mxu0 0.0
  %1079 = vmatpush1.msra.mxu0 %v1055
  %1080 = vmatprep.subr.mxu0 0.0
  %1081 = vmatpush1.msra.mxu0 %v1056
  %1082 = vmatprep.subr.mxu0 0.0
  %1083 = vmatpush1.msra.mxu0 %v1057
  %1084 = vmatprep.subr.mxu0 0.0
  %1085 = vmatpush1.msra.mxu0 %v1058
  %1086 = vmatprep.subr.mxu0 0.0
  %1087 = vmatpush1.msra.mxu0 %v1059
  %1088 = vmatprep.subr.mxu0 0.0
  %1089 = vmatpush1.msra.mxu0 %v1060
  %1090 = vmatprep.subr.mxu0 0.0
  %1091 = vmatpush1.msra.mxu0 %v1061
  %1092 = vmatprep.subr.mxu0 0.0
  %1093 = vmatpush1.msra.mxu0 %v1062
  %1094 = vmatprep.subr.mxu0 0.0
  %1095 = vmatpush1.msra.mxu0 %v1063
  %1096 = vmatprep.subr.mxu0 0.0
  %1097 = vmatpush1.msra.mxu0 0.0
  %1098 = vmatprep.subr.mxu0 0.0
  %1099 = vmatpush1.msra.mxu0 0.0
  %1100 = vmatprep.subr.mxu0 0.0
  %1101 = vmatpush1.msra.mxu0 0.0
  %1102 = vmatprep.subr.mxu0 0.0
  %1103 = vmatpush1.msra.mxu0 0.0
  %1104 = vmatprep.subr.mxu0 0.0
  %1105 = vmatpush1.msra.mxu0 0.0
  %1106 = vmatprep.subr.mxu0 0.0
  %1107 = vmatpush1.msra.mxu0 0.0
  %1108 = vmatprep.subr.mxu0 0.0
  %1109 = vmatpush1.msra.mxu0 0.0
  %1110 = vmatprep.subr.mxu0 0.0
  %1111 = vmatpush1.msra.mxu0 0.0
  %1112 = vmatprep.subr.mxu0 0.0
  %1113 = vmatpush1.msra.mxu0 0.0
  %1114 = vmatprep.subr.mxu0 0.0
  %1115 = vmatpush1.msra.mxu0 0.0
  %1116 = vmatprep.subr.mxu0 0.0
  %1117 = vmatpush1.msra.mxu0 0.0
  %1118 = vmatprep.subr.mxu0 0.0
  %1119 = vmatpush1.msra.mxu0 0.0
  %1120 = vmatprep.subr.mxu0 0.0
  %1121 = vmatpush1.msra.mxu0 0.0
  %1122 = vmatprep.subr.mxu0 0.0
  %1123 = vmatpush1.msra.mxu0 0.0
  %1124 = vmatprep.subr.mxu0 0.0
  %1125 = vmatpush1.msra.mxu0 0.0
  %1126 = vmatprep.subr.mxu0 0.0
  %1127 = vmatpush1.msra.mxu0 0.0
  %1128 = vmatprep.mubr.f32.mxu0 0.0
  %1129 = vmatmul.mubr.f32.gmra.mrb[0].mxu0 %v823
  %v1130 = vpop.f32.mrb[0].mxu0
  %v1131 = vadd.f32 0.0, %v1130
  %v1132 = vpop.f32.mrb[0].mxu0
  %1133 = vmatprep.mubr.f32.mxu0 0.0
  %1134 = vmatmul.mubr.f32.gmra.mrb[0].mxu0 %v824
  %v1135 = vpop.f32.mrb[0].mxu0
  %v1136 = vadd.f32 0.0, %v1135
  %v1137 = vpop.f32.mrb[0].mxu0
  %1138 = vmatprep.mubr.f32.mxu0 0.0
  %1139 = vmatmul.mubr.f32.gmra.mrb[0].mxu0 %v825
  %v1140 = vpop.f32.mrb[0].mxu0
  %v1141 = vadd.f32 0.0, %v1140
  %v1142 = vpop.f32.mrb[0].mxu0
  %1143 = vmatprep.mubr.f32.mxu0 0.0
  %1144 = vmatmul.mubr.f32.gmra.mrb[0].mxu0 %v826
  %v1145 = vpop.f32.mrb[0].mxu0
  %v1146 = vadd.f32 0.0, %v1145
  %v1147 = vpop.f32.mrb[0].mxu0
  %1148 = vdwg.mxu0
  %v1149 = vadd.f32 %v1043, %v1131
  %v1150 = vadd.f32 %v1044, %v1136
  %v1151 = vadd.f32 %v1045, %v1141
  %v1152 = vadd.f32 %v1046, %v1146
  %1153 = vst [vmem:[%s3] sm:$0xff] %v1149
  %1154 = vst [vmem:[%s3 + $0x8] sm:$0xff] %v1150
  %1155 = vst [vmem:[%s3 + $0x10] sm:$0xff] %v1151
  %1156 = vst [vmem:[%s3 + $0x18] sm:$0xff] %v1152
  // Predicated region
  $region14: #{fwd.1} parent=0 // pred_check
    _
  $region15: #{fwd.1} parent=0 // pred_check_branch
    %1158 = sbr.rel (0) target = $region17
  $region16: #{fwd.1} parent=0 // pred_region
    _
  $region17: #{fwd.1} parent=0 // pred_fallthru
    _
  // Predicated region
  $region18: #{fwd.1} parent=0 // pred_check
    _
  $region19: #{fwd.1} parent=0 // pred_check_branch
    %1160 = sbr.rel (0) target = $region21
  $region20: #{fwd.1} parent=0 // pred_region
    _
  $region21: #{fwd.1} parent=0 // pred_fallthru
    _

</llo_original>
